<compile_context>
chip_gen: v7x
topology: tpu7x:2x2x1
jax: 0.10.0
libtpu: 0.0.40
codegen_flags: <defaults>
</compile_context>

<pallas_src>
import math

import jax
import jax.numpy as jnp
from jax.experimental import pallas as pl
from jax.experimental.pallas import tpu as pltpu

C_IN = 500     # fixed by nn.Conv1d(500, 128, 1) in the module's __init__
C_OUT = 128


def _timing_signal(length, channels, min_timescale=1.0, max_timescale=10000.0):
    """get_timing_signal_1d: returns a (length, channels) sinusoid table."""
    num_timescales = channels // 2
    log_timescale_increment = (
        math.log(float(max_timescale) / float(min_timescale))
        / (num_timescales - 1)
    )
    inv_timescales = min_timescale * jnp.exp(
        jnp.arange(num_timescales, dtype=jnp.float32) * -log_timescale_increment
    )
    position = jnp.arange(length, dtype=jnp.float32)
    scaled_time = position[:, None] * inv_timescales[None, :]
    return jnp.concatenate([jnp.sin(scaled_time), jnp.cos(scaled_time)], axis=1)


def _residual_block_kernel(x_ref, wT_ref, b_ref, sig_ref, o_ref):
    """One row tile per grid step (rows = flattened (batch, position)).

    x_ref:   (TR, C_IN)    input rows, lane axis = 500 input channels
    wT_ref:  (C_IN, C_OUT) 1x1-conv weight transposed (VMEM resident)
    b_ref:   (1, C_OUT)    bias lane row (VMEM resident)
    sig_ref: (TR, C_OUT)   pre-scaled, pre-tiled timing signal (VMEM resident)
    o_ref:   (TR, C_OUT)   output rows, lane axis = 128 output channels
    """
    proj = jnp.dot(x_ref[...], wT_ref[...], preferred_element_type=jnp.float32)
    o_ref[...] = (proj + b_ref[...] + sig_ref[...]).astype(o_ref.dtype)
    # TODO(synk): ConvolutionLayer / SelfAttention sublayers are not defined in
    # the reference source, so their per-block transforms cannot be reproduced.


def _pick_row_tile(batch, length, target=512):
    """Largest TR = k*L with k | batch, TR <= target and TR % 8 == 0."""
    good = [
        k for k in range(1, batch + 1)
        if batch % k == 0 and k * length <= target and (k * length) % 8 == 0
    ]
    if good:
        return max(good) * length
    # Full-extent block is always layout-legal (and the signal still tiles).
    return batch * length


def residual_block_forward(x, w, b, *, num_blocks=1, use_bf16=False):
    """x: (B, 500, L) float32 NCL (nn.Conv1d layout). Returns (B, 128, L) f32."""
    B, c_in, L = x.shape
    assert c_in == C_IN
    # The module's add_timing_signal_1d on the NCL output uses channels = L:
    # it needs L even (torch.cat([sin, cos]) must give exactly L cols) and
    # L >= 4 (division by num_timescales - 1).
    assert L % 2 == 0 and L >= 4, "ResidualBlock timing signal requires even L >= 4"

    rows = B * L
    TR = _pick_row_tile(B, L)
    grid = (rows // TR,)

    # NCL -> NLC -> (rows, C_IN): lane-dense input stream.
    x_rows = jnp.transpose(x, (0, 2, 1)).reshape(rows, C_IN)
    wT = jnp.transpose(w)              # (C_IN, C_OUT)
    b_row = b.reshape(1, C_OUT)

    # Timing signal per the module's exact (transposed-looking) convention:
    # table is (length=128, channels=L); in NLC we add its transpose (L, 128).
    # Pre-scale by num_blocks and pre-tile to the row-tile height so the kernel
    # performs exactly one add.
    sig = _timing_signal(C_OUT, L).T * float(num_blocks)        # (L, C_OUT)
    sig_tile = jnp.tile(sig, (TR // L, 1)).astype(jnp.float32)  # (TR, C_OUT)

    if use_bf16:
        # Halves the HBM-bound x stream and uses the native bf16 MXU path;
        # accumulation stays f32 via preferred_element_type in the kernel.
        x_rows = x_rows.astype(jnp.bfloat16)
        wT = wT.astype(jnp.bfloat16)

    out_rows = pl.pallas_call(
        _residual_block_kernel,
        out_shape=jax.ShapeDtypeStruct((rows, C_OUT), jnp.float32),
        grid=grid,
        in_specs=[
            pl.BlockSpec((TR, C_IN), lambda i: (i, 0)),
            pl.BlockSpec((C_IN, C_OUT), lambda i: (0, 0)),
            pl.BlockSpec((1, C_OUT), lambda i: (0, 0)),
            pl.BlockSpec((TR, C_OUT), lambda i: (0, 0)),
        ],
        out_specs=pl.BlockSpec((TR, C_OUT), lambda i: (i, 0)),
        compiler_params=pltpu.CompilerParams(
            dimension_semantics=("parallel",),
            vmem_limit_bytes=32 * 1024 * 1024,
        ),
    )(x_rows, wT, b_row, sig_tile)

    # Back to the module's NCL output layout (B, 128, L).
    return jnp.transpose(out_rows.reshape(B, L, C_OUT), (0, 2, 1))


def _reference_forward(x, w, b, *, num_blocks=1):
    """Pure-JAX reference mirroring the PyTorch semantics (for validation)."""
    proj = jnp.einsum("oc,bcl->bol", w, x) + b[None, :, None]   # (B, 128, L)
    length, channels = proj.shape[1], proj.shape[2]             # 128, L
    half = channels // 2
    log_inc = math.log(10000.0 / 1.0) / float(half - 1)
    position = jnp.arange(length, dtype=jnp.float32)
    inv_ts = jnp.exp(jnp.arange(half, dtype=jnp.float32) * (-log_inc))
    scaled = position[:, None] * inv_ts[None, :]
    signal = jnp.concatenate([jnp.sin(scaled), jnp.cos(scaled)], axis=1)
    signal = signal.reshape(1, length, channels)
    out = proj
    for _ in range(num_blocks):
        out = out + signal
    return out


if __name__ == "__main__":
    key = jax.random.PRNGKey(0)
    kx, kw, kb = jax.random.split(key, 3)

    B, L = 2, 16  # small demo seq length; channel dims fixed by the module
    x = jax.random.normal(kx, (B, C_IN, L), dtype=jnp.float32)

    # Deterministic parameter init (Conv1d(500, 128, 1) weight/bias shapes).
    fan_in = C_IN * 1
    bound = 1.0 / math.sqrt(fan_in)
    w = jax.random.uniform(kw, (C_OUT, C_IN), jnp.float32, -bound, bound)
    b = jax.random.uniform(kb, (C_OUT,), jnp.float32, -bound, bound)

    for nb in (1, 3):
        out = residual_block_forward(x, w, b, num_blocks=nb)
        out = jax.block_until_ready(out)
        ref = _reference_forward(x, w, b, num_blocks=nb)
        assert out.shape == (B, C_OUT, L)
        assert jnp.allclose(out, ref, atol=1e-4, rtol=1e-4), (
            f"mismatch vs reference (num_blocks={nb})"
        )

    print("KERNEL_OK")
</pallas_src>

<mosaic_0001>
module attributes {stable_mosaic.version = 11 : i64} {
  func.func @_residual_block_kernel(%arg0: i32, %arg1: memref<32x500xf32, #tpu.memory_space<vmem>>, %arg2: memref<500x128xf32, #tpu.memory_space<vmem>>, %arg3: memref<1x128xf32, #tpu.memory_space<vmem>>, %arg4: memref<32x128xf32, #tpu.memory_space<vmem>>, %arg5: memref<32x128xf32, #tpu.memory_space<vmem>>) attributes {dimension_semantics = [#tpu.dimension_semantics<parallel>], iteration_bounds = array<i64: 1>, scalar_prefetch = 0 : i64, scratch_operands = 0 : i64, tpu.core_type = #tpu.core_type<tc>, window_params = [{transform_indices = @transform_0, window_bounds = array<i64: 32, 500>}, {pipeline_mode = #tpu.pipeline_mode<synchronous>, transform_indices = @transform_1, window_bounds = array<i64: 500, 128>}, {pipeline_mode = #tpu.pipeline_mode<synchronous>, transform_indices = @transform_2, window_bounds = array<i64: 1, 128>}, {pipeline_mode = #tpu.pipeline_mode<synchronous>, transform_indices = @transform_3, window_bounds = array<i64: 32, 128>}, {transform_indices = @transform_4, window_bounds = array<i64: 32, 128>}]} {
    %c0 = arith.constant 0 : index
    %c0_0 = arith.constant 0 : index
    %0 = vector.load %arg1[%c0, %c0_0] : memref<32x500xf32, #tpu.memory_space<vmem>>, vector<32x500xf32>
    %c0_1 = arith.constant 0 : index
    %c0_2 = arith.constant 0 : index
    %1 = vector.load %arg2[%c0_1, %c0_2] : memref<500x128xf32, #tpu.memory_space<vmem>>, vector<500x128xf32>
    %cst = arith.constant dense<0.000000e+00> : vector<32x128xf32>
    %2 = tpu.matmul %0, %1, %cst {dimension_numbers = #tpu.dot_dimension_numbers<[1], [0], [0], [1], [0, 0, 1, 1], [], []>} : vector<32x500xf32>, vector<500x128xf32>, vector<32x128xf32> -> vector<32x128xf32>
    %c0_3 = arith.constant 0 : index
    %c0_4 = arith.constant 0 : index
    %3 = vector.load %arg3[%c0_3, %c0_4] : memref<1x128xf32, #tpu.memory_space<vmem>>, vector<1x128xf32>
    %4 = vector.broadcast %3 : vector<1x128xf32> to vector<32x128xf32>
    %5 = arith.addf %2, %4 : vector<32x128xf32>
    %c0_5 = arith.constant 0 : index
    %c0_6 = arith.constant 0 : index
    %6 = vector.load %arg4[%c0_5, %c0_6] : memref<32x128xf32, #tpu.memory_space<vmem>>, vector<32x128xf32>
    %7 = arith.addf %5, %6 : vector<32x128xf32>
    %c0_7 = arith.constant 0 : index
    %c0_8 = arith.constant 0 : index
    %8 = vector.load %arg5[%c0_7, %c0_8] : memref<32x128xf32, #tpu.memory_space<vmem>>, vector<32x128xf32>
    tpu.vector_store %arg5[%c0_7, %c0_8], %7 {strides = array<i32>} : memref<32x128xf32, #tpu.memory_space<vmem>>, vector<32x128xf32>,
    return
  }
  func.func @transform_0(%arg0: i32) -> (i32, i32) {
    %c0_i32 = arith.constant 0 : i32
    %c0_i32_0 = arith.constant 0 : i32
    return %arg0, %c0_i32 : i32, i32
  }
  func.func @transform_1(%arg0: i32) -> (i32, i32) {
    %c0_i32 = arith.constant 0 : i32
    %c0_i32_0 = arith.constant 0 : i32
    %c0_i32_1 = arith.constant 0 : i32
    return %c0_i32, %c0_i32_0 : i32, i32
  }
  func.func @transform_2(%arg0: i32) -> (i32, i32) {
    %c0_i32 = arith.constant 0 : i32
    %c0_i32_0 = arith.constant 0 : i32
    %c0_i32_1 = arith.constant 0 : i32
    return %c0_i32, %c0_i32_0 : i32, i32
  }
  func.func @transform_3(%arg0: i32) -> (i32, i32) {
    %c0_i32 = arith.constant 0 : i32
    %c0_i32_0 = arith.constant 0 : i32
    %c0_i32_1 = arith.constant 0 : i32
    return %c0_i32, %c0_i32_0 : i32, i32
  }
  func.func @transform_4(%arg0: i32) -> (i32, i32) {
    %c0_i32 = arith.constant 0 : i32
    %c0_i32_0 = arith.constant 0 : i32
    return %arg0, %c0_i32 : i32, i32
  }
}

</mosaic_0001>

<llo_original>
// kernel: tpu_custom_call.1
$region0: #{tpu_custom_call.1}
  #allocation0 [shape = 'u32[]', space=smem, size = 0x4, offset = 0x4, fixed_abs, tag = 'smem constant byte address 0x4 - core index']
  #allocation1 [shape = 'u32[144,128]{1,0:T(1,128)}', space=vmem, size = 0x12000, scoped, tag = 'internal scratch']
  %s0 = inlined_call_operand.hbm [shape: f32[32,500], index: 0, kind: input, shape index: {}]
  %s1 = inlined_call_operand.hbm [shape: f32[500,128], index: 1, kind: input, shape index: {}]
  %s2 = inlined_call_operand.vmem [shape: f32[1,128], index: 2, kind: input, shape index: {}]
  %s3 = inlined_call_operand.hbm [shape: f32[32,128], index: 3, kind: input, shape index: {}]
  %s4 = inlined_call_operand.hbm [shape: f32[32,128], index: 4, kind: output, shape index: {}]
  %s5 = sld [smem:[#allocation0]]
  $region38: #{tpu_custom_call.1} parent=0
    _
  %s7 = ssub.s32 1, %s5
  %s8 = scalar_select 0, %s7, %s5
  $region1: #{tpu_custom_call.1} parent=0
    #allocation2 [shape = 'u8[65536]{0}', space=vmem, size = 0x10000, scoped, tag = 'input window, operand 0, single buffered']
    #allocation3 [shape = 's32[1]{0}', space=sflag, size = 0x4, scoped, tag = 'scoped memory for tpu_custom_call.1']
    #allocation4 [shape = 's32[1]{0}', space=sflag, size = 0x4, scoped, tag = 'scoped memory for tpu_custom_call.1']
    #allocation5 [shape = 'u8[258048]{0}', space=vmem, size = 0x3f000, scoped, tag = 'input window, operand 1, single buffered']
    #allocation6 [shape = 's32[1]{0}', space=sflag, size = 0x4, scoped, tag = 'scoped memory for tpu_custom_call.1']
    #allocation7 [shape = 'u8[16384]{0}', space=vmem, size = 0x4000, scoped, tag = 'input window, operand 3, single buffered']
    #allocation8 [shape = 'u8[16384]{0}', space=vmem, size = 0x4000, scoped, tag = 'output window, operand 0, single buffered']
    %9 = vsyncpa [#allocation3], 0
    %10 = vsyncpa [#allocation6], 0
    %11 = vsyncpa [#allocation4], 0
    // Predicated region
    $region2: #{tpu_custom_call.1} parent=1 // pred_check
      _
    $region3: #{tpu_custom_call.1} parent=1 // pred_check_branch
      %13 = sbr.rel (0) target = $region5
    $region4: #{tpu_custom_call.1} parent=1 // pred_region
      %s15 = ssub.s32 2048, 2048
      %16 = vsyncadd [#allocation3], %s15
      %s17 = sshll.u32 [#allocation2], 4
      %s18 = int_to_ptr.vmem [resolvable:$true] %s17
      %23 = dma.hbm_to_vmem [thread:$0]  %s0, 2048, %s18, [#allocation3], 512, 512, 32
    $region5: #{tpu_custom_call.1} parent=1 // pred_fallthru
      _
    // Predicated region
    $region6: #{tpu_custom_call.1} parent=1 // pred_check
      _
    $region7: #{tpu_custom_call.1} parent=1 // pred_check_branch
      %25 = sbr.rel (0) target = $region9
    $region8: #{tpu_custom_call.1} parent=1 // pred_region
      %s27 = ssub.s32 8064, 8064
      %28 = vsyncadd [#allocation6], %s27
      %s29 = sshll.u32 [#allocation5], 4
      %s30 = int_to_ptr.vmem [resolvable:$true] %s29
      %35 = dma.hbm_to_vmem [thread:$0]  %s1, 8064, %s30, [#allocation6], 128, 128, 8
    $region9: #{tpu_custom_call.1} parent=1 // pred_fallthru
      _
    // Predicated region
    $region10: #{tpu_custom_call.1} parent=1 // pred_check
      _
    $region11: #{tpu_custom_call.1} parent=1 // pred_check_branch
      %37 = sbr.rel (0) target = $region13
    $region12: #{tpu_custom_call.1} parent=1 // pred_region
      _
    $region13: #{tpu_custom_call.1} parent=1 // pred_fallthru
      _
    // Predicated region
    $region14: #{tpu_custom_call.1} parent=1 // pred_check
      _
    $region15: #{tpu_custom_call.1} parent=1 // pred_check_branch
      %39 = sbr.rel (0) target = $region17
    $region16: #{tpu_custom_call.1} parent=1 // pred_region
      %s41 = ssub.s32 512, 512
      %42 = vsyncadd [#allocation6], %s41
      %s43 = sshll.u32 [#allocation7], 4
      %s44 = int_to_ptr.vmem [resolvable:$true] %s43
      %49 = dma.hbm_to_vmem [thread:$0]  %s3, 512, %s44, [#allocation6], 128, 128, 8
    $region17: #{tpu_custom_call.1} parent=1 // pred_fallthru
      _
    // Predicated region
    $region18: #{tpu_custom_call.1} parent=1 // pred_check
      _
    $region19: #{tpu_custom_call.1} parent=1 // pred_check_branch
      %51 = sbr.rel (0) target = $region21
    $region20: #{tpu_custom_call.1} parent=1 // pred_region
      %52 = dma.done [#allocation3], 2048
    $region21: #{tpu_custom_call.1} parent=1 // pred_fallthru
      _
    // Predicated region
    $region22: #{tpu_custom_call.1} parent=1 // pred_check
      _
    $region23: #{tpu_custom_call.1} parent=1 // pred_check_branch
      %54 = sbr.rel (0) target = $region25
    $region24: #{tpu_custom_call.1} parent=1 // pred_region
      %55 = dma.done [#allocation6], 8064
    $region25: #{tpu_custom_call.1} parent=1 // pred_fallthru
      _
    // Predicated region
    $region26: #{tpu_custom_call.1} parent=1 // pred_check
      _
    $region27: #{tpu_custom_call.1} parent=1 // pred_check_branch
      %57 = sbr.rel (0) target = $region29
    $region28: #{tpu_custom_call.1} parent=1 // pred_region
      %58 = dma.done [#allocation6], 512
    $region29: #{tpu_custom_call.1} parent=1 // pred_fallthru
      _
    %v59 = vld [vmem:[#allocation2] sm:$0xff]
    %v60 = vld [vmem:[#allocation2 + $0x8] sm:$0xff]
    %v61 = vld [vmem:[#allocation2 + $0x10] sm:$0xff]
    %v62 = vld [vmem:[#allocation2 + $0x18] sm:$0xff]
    %v63 = vld [vmem:[#allocation2 + $0x20] sm:$0xff]
    %v64 = vld [vmem:[#allocation2 + $0x28] sm:$0xff]
    %v65 = vld [vmem:[#allocation2 + $0x30] sm:$0xff]
    %v66 = vld [vmem:[#allocation2 + $0x38] sm:$0xff]
    %v67 = vld [vmem:[#allocation2 + $0x40] sm:$0xff]
    %v68 = vld [vmem:[#allocation2 + $0x48] sm:$0xff]
    %v69 = vld [vmem:[#allocation2 + $0x50] sm:$0xff]
    %v70 = vld [vmem:[#allocation2 + $0x58] sm:$0xff]
    %v71 = vld [vmem:[#allocation2 + $0x60] sm:$0xff]
    %v72 = vld [vmem:[#allocation2 + $0x68] sm:$0xff]
    %v73 = vld [vmem:[#allocation2 + $0x70] sm:$0xff]
    %v74 = vld [vmem:[#allocation2 + $0x78] sm:$0xff]
    %v75 = vld [vmem:[#allocation5] sm:$0xff]
    %v76 = vld [vmem:[#allocation5 + $0x8] sm:$0xff]
    %v77 = vld [vmem:[#allocation5 + $0x10] sm:$0xff]
    %v78 = vld [vmem:[#allocation5 + $0x18] sm:$0xff]
    %v79 = vld [vmem:[#allocation5 + $0x20] sm:$0xff]
    %v80 = vld [vmem:[#allocation5 + $0x28] sm:$0xff]
    %v81 = vld [vmem:[#allocation5 + $0x30] sm:$0xff]
    %v82 = vld [vmem:[#allocation5 + $0x38] sm:$0xff]
    %v83 = vld [vmem:[#allocation5 + $0x40] sm:$0xff]
    %v84 = vld [vmem:[#allocation5 + $0x48] sm:$0xff]
    %v85 = vld [vmem:[#allocation5 + $0x50] sm:$0xff]
    %v86 = vld [vmem:[#allocation5 + $0x58] sm:$0xff]
    %v87 = vld [vmem:[#allocation5 + $0x60] sm:$0xff]
    %v88 = vld [vmem:[#allocation5 + $0x68] sm:$0xff]
    %v89 = vld [vmem:[#allocation5 + $0x70] sm:$0xff]
    %v90 = vld [vmem:[#allocation5 + $0x78] sm:$0xff]
    %v91 = vld [vmem:[#allocation5 + $0x80] sm:$0xff]
    %v92 = vld [vmem:[#allocation5 + $0x88] sm:$0xff]
    %v93 = vld [vmem:[#allocation5 + $0x90] sm:$0xff]
    %v94 = vld [vmem:[#allocation5 + $0x98] sm:$0xff]
    %v95 = vld [vmem:[#allocation5 + $0xa0] sm:$0xff]
    %v96 = vld [vmem:[#allocation5 + $0xa8] sm:$0xff]
    %v97 = vld [vmem:[#allocation5 + $0xb0] sm:$0xff]
    %v98 = vld [vmem:[#allocation5 + $0xb8] sm:$0xff]
    %v99 = vld [vmem:[#allocation5 + $0xc0] sm:$0xff]
    %v100 = vld [vmem:[#allocation5 + $0xc8] sm:$0xff]
    %v101 = vld [vmem:[#allocation5 + $0xd0] sm:$0xff]
    %v102 = vld [vmem:[#allocation5 + $0xd8] sm:$0xff]
    %v103 = vld [vmem:[#allocation5 + $0xe0] sm:$0xff]
    %v104 = vld [vmem:[#allocation5 + $0xe8] sm:$0xff]
    %v105 = vld [vmem:[#allocation5 + $0xf0] sm:$0xff]
    %v106 = vld [vmem:[#allocation5 + $0xf8] sm:$0xff]
    %v107 = vld [vmem:[#allocation5 + $0x100] sm:$0xff]
    %v108 = vld [vmem:[#allocation5 + $0x108] sm:$0xff]
    %v109 = vld [vmem:[#allocation5 + $0x110] sm:$0xff]
    %v110 = vld [vmem:[#allocation5 + $0x118] sm:$0xff]
    %v111 = vld [vmem:[#allocation5 + $0x120] sm:$0xff]
    %v112 = vld [vmem:[#allocation5 + $0x128] sm:$0xff]
    %v113 = vld [vmem:[#allocation5 + $0x130] sm:$0xff]
    %v114 = vld [vmem:[#allocation5 + $0x138] sm:$0xff]
    %v115 = vld [vmem:[#allocation5 + $0x140] sm:$0xff]
    %v116 = vld [vmem:[#allocation5 + $0x148] sm:$0xff]
    %v117 = vld [vmem:[#allocation5 + $0x150] sm:$0xff]
    %v118 = vld [vmem:[#allocation5 + $0x158] sm:$0xff]
    %v119 = vld [vmem:[#allocation5 + $0x160] sm:$0xff]
    %v120 = vld [vmem:[#allocation5 + $0x168] sm:$0xff]
    %v121 = vld [vmem:[#allocation5 + $0x170] sm:$0xff]
    %v122 = vld [vmem:[#allocation5 + $0x178] sm:$0xff]
    %v123 = vld [vmem:[#allocation5 + $0x180] sm:$0xff]
    %v124 = vld [vmem:[#allocation5 + $0x188] sm:$0xff]
    %v125 = vld [vmem:[#allocation5 + $0x190] sm:$0xff]
    %v126 = vld [vmem:[#allocation5 + $0x198] sm:$0xff]
    %v127 = vld [vmem:[#allocation5 + $0x1a0] sm:$0xff]
    %v128 = vld [vmem:[#allocation5 + $0x1a8] sm:$0xff]
    %v129 = vld [vmem:[#allocation5 + $0x1b0] sm:$0xff]
    %v130 = vld [vmem:[#allocation5 + $0x1b8] sm:$0xff]
    %v131 = vld [vmem:[#allocation5 + $0x1c0] sm:$0xff]
    %v132 = vld [vmem:[#allocation5 + $0x1c8] sm:$0xff]
    %v133 = vld [vmem:[#allocation5 + $0x1d0] sm:$0xff]
    %v134 = vld [vmem:[#allocation5 + $0x1d8] sm:$0xff]
    %v135 = vld [vmem:[#allocation5 + $0x1e0] sm:$0xff]
    %v136 = vld [vmem:[#allocation5 + $0x1e8] sm:$0xff]
    %v137 = vld [vmem:[#allocation5 + $0x1f0] sm:$0xf]
    %v138 = vld [vmem:[%s2] sm:$0x1]
    %v140 = vlaneseq
    %v141 = vshrl.u32 %v140, 7
    %v142 = vsub.s32 0, %v141
    %v143 = vrot.slane %v138, %v142
    %vm145 = vcmask 949248
    %v147 = vsel %vm145, %v62, 0
    %v150 = vsel %vm145, %v66, 0
    %v153 = vsel %vm145, %v70, 0
    %v156 = vsel %vm145, %v74, 0
    %vm158 = vcmask 1043456
    %v160 = vsel %vm158, %v137, 0
    %162 = vmatprep.subr.mxu0 0.0
    %163 = vmatpush1.msra.mxu0 %v75
    %164 = vmatprep.subr.mxu0 0.0
    %165 = vmatpush1.msra.mxu0 %v76
    %166 = vmatprep.subr.mxu0 0.0
    %167 = vmatpush1.msra.mxu0 %v77
    %168 = vmatprep.subr.mxu0 0.0
    %169 = vmatpush1.msra.mxu0 %v78
    %170 = vmatprep.subr.mxu0 0.0
    %171 = vmatpush1.msra.mxu0 %v79
    %172 = vmatprep.subr.mxu0 0.0
    %173 = vmatpush1.msra.mxu0 %v80
    %174 = vmatprep.subr.mxu0 0.0
    %175 = vmatpush1.msra.mxu0 %v81
    %176 = vmatprep.subr.mxu0 0.0
    %177 = vmatpush1.msra.mxu0 %v82
    %178 = vmatprep.subr.mxu0 0.0
    %179 = vmatpush1.msra.mxu0 %v83
    %180 = vmatprep.subr.mxu0 0.0
    %181 = vmatpush1.msra.mxu0 %v84
    %182 = vmatprep.subr.mxu0 0.0
    %183 = vmatpush1.msra.mxu0 %v85
    %184 = vmatprep.subr.mxu0 0.0
    %185 = vmatpush1.msra.mxu0 %v86
    %186 = vmatprep.subr.mxu0 0.0
    %187 = vmatpush1.msra.mxu0 %v87
    %188 = vmatprep.subr.mxu0 0.0
    %189 = vmatpush1.msra.mxu0 %v88
    %190 = vmatprep.subr.mxu0 0.0
    %191 = vmatpush1.msra.mxu0 %v89
    %192 = vmatprep.subr.mxu0 0.0
    %193 = vmatpush1.msra.mxu0 %v90
    %194 = vmatprep.subr.mxu0 0.0
    %195 = vmatpush1.msra.mxu0 %v91
    %196 = vmatprep.subr.mxu0 0.0
    %197 = vmatpush1.msra.mxu0 %v92
    %198 = vmatprep.subr.mxu0 0.0
    %199 = vmatpush1.msra.mxu0 %v93
    %200 = vmatprep.subr.mxu0 0.0
    %201 = vmatpush1.msra.mxu0 %v94
    %202 = vmatprep.subr.mxu0 0.0
    %203 = vmatpush1.msra.mxu0 %v95
    %204 = vmatprep.subr.mxu0 0.0
    %205 = vmatpush1.msra.mxu0 %v96
    %206 = vmatprep.subr.mxu0 0.0
    %207 = vmatpush1.msra.mxu0 %v97
    %208 = vmatprep.subr.mxu0 0.0
    %209 = vmatpush1.msra.mxu0 %v98
    %210 = vmatprep.subr.mxu0 0.0
    %211 = vmatpush1.msra.mxu0 %v99
    %212 = vmatprep.subr.mxu0 0.0
    %213 = vmatpush1.msra.mxu0 %v100
    %214 = vmatprep.subr.mxu0 0.0
    %215 = vmatpush1.msra.mxu0 %v101
    %216 = vmatprep.subr.mxu0 0.0
    %217 = vmatpush1.msra.mxu0 %v102
    %218 = vmatprep.subr.mxu0 0.0
    %219 = vmatpush1.msra.mxu0 %v103
    %220 = vmatprep.subr.mxu0 0.0
    %221 = vmatpush1.msra.mxu0 %v104
    %222 = vmatprep.subr.mxu0 0.0
    %223 = vmatpush1.msra.mxu0 %v105
    %224 = vmatprep.subr.mxu0 0.0
    %225 = vmatpush1.msra.mxu0 %v106
    %226 = vmatprep.mubr.f32.mxu0 %v60
    %227 = vmatmul.mubr.f32.gmra.mrb[0].mxu0 %v59
    %v228 = vpop.f32.mrb[0].mxu0
    %v229 = vadd.f32 %v143, %v228
    %v230 = vpop.f32.mrb[0].mxu0
    %231 = vmatprep.mubr.f32.mxu0 %v64
    %232 = vmatmul.mubr.f32.gmra.mrb[0].mxu0 %v63
    %v233 = vpop.f32.mrb[0].mxu0
    %v234 = vadd.f32 %v143, %v233
    %v235 = vpop.f32.mrb[0].mxu0
    %236 = vmatprep.mubr.f32.mxu0 %v68
    %237 = vmatmul.mubr.f32.gmra.mrb[0].mxu0 %v67
    %v238 = vpop.f32.mrb[0].mxu0
    %v239 = vadd.f32 %v143, %v238
    %v240 = vpop.f32.mrb[0].mxu0
    %241 = vmatprep.mubr.f32.mxu0 %v72
    %242 = vmatmul.mubr.f32.gmra.mrb[0].mxu0 %v71
    %v243 = vpop.f32.mrb[0].mxu0
    %v244 = vadd.f32 %v143, %v243
    %v245 = vpop.f32.mrb[0].mxu0
    %246 = vdwg.mxu0
    %247 = vmatprep.subr.mxu0 0.0
    %248 = vmatpush1.msra.mxu0 %v107
    %249 = vmatprep.subr.mxu0 0.0
    %250 = vmatpush1.msra.mxu0 %v108
    %251 = vmatprep.subr.mxu0 0.0
    %252 = vmatpush1.msra.mxu0 %v109
    %253 = vmatprep.subr.mxu0 0.0
    %254 = vmatpush1.msra.mxu0 %v110
    %255 = vmatprep.subr.mxu0 0.0
    %256 = vmatpush1.msra.mxu0 %v111
    %257 = vmatprep.subr.mxu0 0.0
    %258 = vmatpush1.msra.mxu0 %v112
    %259 = vmatprep.subr.mxu0 0.0
    %260 = vmatpush1.msra.mxu0 %v113
    %261 = vmatprep.subr.mxu0 0.0
    %262 = vmatpush1.msra.mxu0 %v114
    %263 = vmatprep.subr.mxu0 0.0
    %264 = vmatpush1.msra.mxu0 %v115
    %265 = vmatprep.subr.mxu0 0.0
    %266 = vmatpush1.msra.mxu0 %v116
    %267 = vmatprep.subr.mxu0 0.0
    %268 = vmatpush1.msra.mxu0 %v117
    %269 = vmatprep.subr.mxu0 0.0
    %270 = vmatpush1.msra.mxu0 %v118
    %271 = vmatprep.subr.mxu0 0.0
    %272 = vmatpush1.msra.mxu0 %v119
    %273 = vmatprep.subr.mxu0 0.0
    %274 = vmatpush1.msra.mxu0 %v120
    %275 = vmatprep.subr.mxu0 0.0
    %276 = vmatpush1.msra.mxu0 %v121
    %277 = vmatprep.subr.mxu0 0.0
    %278 = vmatpush1.msra.mxu0 %v122
    %279 = vmatprep.subr.mxu0 0.0
    %280 = vmatpush1.msra.mxu0 %v123
    %281 = vmatprep.subr.mxu0 0.0
    %282 = vmatpush1.msra.mxu0 %v124
    %283 = vmatprep.subr.mxu0 0.0
    %284 = vmatpush1.msra.mxu0 %v125
    %285 = vmatprep.subr.mxu0 0.0
    %286 = vmatpush1.msra.mxu0 %v126
    %287 = vmatprep.subr.mxu0 0.0
    %288 = vmatpush1.msra.mxu0 %v127
    %289 = vmatprep.subr.mxu0 0.0
    %290 = vmatpush1.msra.mxu0 %v128
    %291 = vmatprep.subr.mxu0 0.0
    %292 = vmatpush1.msra.mxu0 %v129
    %293 = vmatprep.subr.mxu0 0.0
    %294 = vmatpush1.msra.mxu0 %v130
    %295 = vmatprep.subr.mxu0 0.0
    %296 = vmatpush1.msra.mxu0 %v131
    %297 = vmatprep.subr.mxu0 0.0
    %298 = vmatpush1.msra.mxu0 %v132
    %299 = vmatprep.subr.mxu0 0.0
    %300 = vmatpush1.msra.mxu0 %v133
    %301 = vmatprep.subr.mxu0 0.0
    %302 = vmatpush1.msra.mxu0 %v134
    %303 = vmatprep.subr.mxu0 0.0
    %304 = vmatpush1.msra.mxu0 %v135
    %305 = vmatprep.subr.mxu0 0.0
    %306 = vmatpush1.msra.mxu0 %v136
    %307 = vmatprep.subr.mxu0 0.0
    %308 = vmatpush1.msra.mxu0 %v160
    %309 = vmatprep.subr.mxu0 0.0
    %310 = vmatpush1.msra.mxu0 0.0
    %311 = vmatprep.mubr.f32.mxu0 %v147
    %312 = vmatmul.mubr.f32.gmra.mrb[0].mxu0 %v61
    %v313 = vpop.f32.mrb[0].mxu0
    %v314 = vadd.f32 %v229, %v313
    %v315 = vpop.f32.mrb[0].mxu0
    %316 = vmatprep.mubr.f32.mxu0 %v150
    %317 = vmatmul.mubr.f32.gmra.mrb[0].mxu0 %v65
    %v318 = vpop.f32.mrb[0].mxu0
    %v319 = vadd.f32 %v234, %v318
    %v320 = vpop.f32.mrb[0].mxu0
    %321 = vmatprep.mubr.f32.mxu0 %v153
    %322 = vmatmul.mubr.f32.gmra.mrb[0].mxu0 %v69
    %v323 = vpop.f32.mrb[0].mxu0
    %v324 = vadd.f32 %v239, %v323
    %v325 = vpop.f32.mrb[0].mxu0
    %326 = vmatprep.mubr.f32.mxu0 %v156
    %327 = vmatmul.mubr.f32.gmra.mrb[0].mxu0 %v73
    %v328 = vpop.f32.mrb[0].mxu0
    %v329 = vadd.f32 %v244, %v328
    %v330 = vpop.f32.mrb[0].mxu0
    %331 = vdwg.mxu0
    %v332 = vld [vmem:[#allocation7] sm:$0xff]
    %v333 = vld [vmem:[#allocation7 + $0x8] sm:$0xff]
    %v334 = vld [vmem:[#allocation7 + $0x10] sm:$0xff]
    %v335 = vld [vmem:[#allocation7 + $0x18] sm:$0xff]
    %v336 = vadd.f32 %v314, %v332
    %v337 = vadd.f32 %v319, %v333
    %v338 = vadd.f32 %v324, %v334
    %v339 = vadd.f32 %v329, %v335
    %340 = vst [vmem:[#allocation8] sm:$0xff] %v336
    %341 = vst [vmem:[#allocation8 + $0x8] sm:$0xff] %v337
    %342 = vst [vmem:[#allocation8 + $0x10] sm:$0xff] %v338
    %343 = vst [vmem:[#allocation8 + $0x18] sm:$0xff] %v339
    // Predicated region
    $region30: #{tpu_custom_call.1} parent=1 // pred_check
      _
    $region31: #{tpu_custom_call.1} parent=1 // pred_check_branch
      %345 = sbr.rel (0) target = $region33
    $region32: #{tpu_custom_call.1} parent=1 // pred_region
      %s347 = ssub.s32 512, 512
      %348 = vsyncadd [#allocation4], %s347
      %s349 = sshll.u32 [#allocation8], 4
      %s350 = int_to_ptr.vmem [resolvable:$true] %s349
      %355 = dma.vmem_to_hbm [thread:$0]  %s350, 512, %s4, [#allocation4], 128, 128, 8
    $region33: #{tpu_custom_call.1} parent=1 // pred_fallthru
      _
    // Predicated region
    $region34: #{tpu_custom_call.1} parent=1 // pred_check
      _
    $region35: #{tpu_custom_call.1} parent=1 // pred_check_branch
      %357 = sbr.rel (0) target = $region37
    $region36: #{tpu_custom_call.1} parent=1 // pred_region
      %358 = dma.done [#allocation4], 512
    $region37: #{tpu_custom_call.1} parent=1 // pred_fallthru
      _
    %359 = vsyncpa [#allocation3], 1
    %360 = vsyncpa [#allocation6], 1
    %361 = vsyncpa [#allocation4], 1

</llo_original>
